<compile_context>
chip_gen: v7x
topology: tpu7x:2x2x1
jax: 0.10.0
libtpu: 0.0.40
codegen_flags: <defaults>
</compile_context>

<pallas_src>
import functools

import numpy as np
import jax
import jax.numpy as jnp
from jax.experimental import pallas as pl
from jax.experimental.pallas import tpu as pltpu

EPS = 1e-07
GAMMA = 0.3
_LANE = 128


def _round_up(x, m):
    return (x + m - 1) // m * m


def _round_down(x, m):
    return x // m * m


def _choose_tiles(rows, cs, n_freq):
    """Pick (tile_rows, f_tile, p_pad, n_freq_tiles) so buffers fit in VMEM."""
    full_pad = _round_up(n_freq, _LANE)
    if cs * 2 * full_pad * 4 <= 4 * 1024 * 1024:
        f_tile = full_pad          # whole basis resident (common / test case)
    else:
        f_tile = _LANE             # large scale: stream basis over a grid axis
    p_pad = _round_up(n_freq, f_tile)
    nf = p_pad // f_tile
    # Row tile: 2 signals x 2 pipeline buffers of (tile_rows, cs) f32 <= ~6 MiB.
    cap = max(8, _round_down((6 * 1024 * 1024) // (4 * cs * 4), 8))
    tile_rows = max(8, min(512, cap, _round_up(rows, 8)))
    return tile_rows, f_tile, p_pad, nf


def _vmem_limit_bytes(tile_rows, cs, f_tile):
    # 2 framed inputs x 2 buffers + basis block (x2 buffers) + temporaries + out.
    need = (4 * tile_rows * cs
            + 2 * cs * 2 * f_tile
            + 6 * tile_rows * 2 * f_tile
            + 4 * 8 * 128) * 4
    if need <= 12 * 1024 * 1024:
        return None                # default scoped VMEM is plenty
    return min(int(need * 1.3), 40 * 1024 * 1024)


def _dft_basis_tiled(cs, n_freq, f_tile, nf):
    """[cos | sin] DFT basis laid out in per-frequency-tile blocks.

    Shape (cs, nf * 2 * f_tile).  Block j (columns [j*2*f_tile, (j+1)*2*f_tile))
    holds cos / sin for frequencies [j*f_tile, min((j+1)*f_tile, n_freq)); all
    padded columns are exactly zero, so both signals get re = im = 0 there and
    their contribution to the loss cancels exactly.
    """
    n = np.arange(cs, dtype=np.float64)
    basis = np.zeros((cs, nf * 2 * f_tile), dtype=np.float32)
    for j in range(nf):
        k0 = j * f_tile
        k1 = min(n_freq, k0 + f_tile)
        if k1 <= k0:
            continue
        k = np.arange(k0, k1, dtype=np.float64)
        ang = 2.0 * np.pi * np.outer(n, k) / float(cs)
        c0 = j * 2 * f_tile
        basis[:, c0:c0 + (k1 - k0)] = np.cos(ang)
        basis[:, c0 + f_tile:c0 + f_tile + (k1 - k0)] = np.sin(ang)
    return jnp.asarray(basis)


def _frame_no_gather(x, cs, hop, n_frames, rows_pad):
    """torch.stft framing (center=False, rectangular window) without a gather.

    With hop = cs/4, frames with index f = 4q + r are contiguous cs-sample
    chunks of the signal shifted by r*hop, so framing is 4 slices + free
    reshapes.  Frame order is residue-major, which is irrelevant for the loss
    (mean over frames) as long as target and output are framed identically.
    Returns (rows_pad, cs) with zero-padded rows at the end (they contribute 0).
    """
    B = x.shape[0]
    parts = []
    for r in range(4):
        m_r = (n_frames - r + 3) // 4   # frames f < n_frames with f % 4 == r
        if m_r <= 0:
            continue
        seg = jax.lax.slice_in_dim(x, r * hop, r * hop + m_r * cs, axis=1)
        parts.append(seg.reshape(B * m_r, cs))
    total = B * n_frames
    if rows_pad > total:
        parts.append(jnp.zeros((rows_pad - total, cs), x.dtype))
    return jnp.concatenate(parts, axis=0)


def _spec_loss_kernel(t_ref, o_ref, b_ref, out_ref, *, f_tile):
    """One (row-tile, freq-tile) step: 2 MXU matmuls + fused pow/diff + sum.

    t_ref, o_ref : (tile_rows, cs) framed target / output rows        (VMEM)
    b_ref        : (cs, 2*f_tile) combined [cos | sin] DFT basis block (VMEM)
    out_ref      : (1, 1, 8, 128) lane-dense partial-sum block         (VMEM)
    """
    basis = b_ref[...]

    def pow_mag(frames):
        # One matmul yields [re | im] for every frame row of this tile.
        z = jnp.dot(frames, basis, preferred_element_type=jnp.float32)
        re = z[:, :f_tile]
        im = z[:, f_tile:]
        # clip(|stft|, EPS) ** gamma == exp(0.5*gamma*log(max(re^2+im^2, EPS^2)))
        p = jnp.maximum(re * re + im * im, EPS * EPS)
        return jnp.exp((0.5 * GAMMA) * jnp.log(p))

    d = pow_mag(t_ref[...]) - pow_mag(o_ref[...])
    out_ref[...] = jnp.broadcast_to(jnp.sum(d * d), (1, 1, 8, 128))


def _spectrogram_scale_loss(output, target, cs):
    """mean over batch of SpectrogramLoss per-element losses for one scale."""
    B, T = output.shape
    assert cs % 4 == 0 and T >= cs, "chunk_size must divide by 4 and be <= T"
    hop = cs // 4
    n_frames = 1 + (T - cs) // hop
    n_freq = cs // 2 + 1

    rows = B * n_frames
    tile_rows, f_tile, p_pad, nf = _choose_tiles(rows, cs, n_freq)
    nr = pl.cdiv(rows, tile_rows)
    rows_pad = nr * tile_rows

    tgt_frames = _frame_no_gather(target.astype(jnp.float32), cs, hop, n_frames, rows_pad)
    out_frames = _frame_no_gather(output.astype(jnp.float32), cs, hop, n_frames, rows_pad)
    basis = _dft_basis_tiled(cs, n_freq, f_tile, nf)

    partials = pl.pallas_call(
        functools.partial(_spec_loss_kernel, f_tile=f_tile),
        out_shape=jax.ShapeDtypeStruct((nr, nf, 8, 128), jnp.float32),
        grid=(nr, nf),
        in_specs=[
            pl.BlockSpec((tile_rows, cs), lambda i, j: (i, 0)),
            pl.BlockSpec((tile_rows, cs), lambda i, j: (i, 0)),
            pl.BlockSpec((cs, 2 * f_tile), lambda i, j: (0, j)),
        ],
        out_specs=pl.BlockSpec((1, 1, 8, 128), lambda i, j: (i, j, 0, 0)),
        compiler_params=pltpu.CompilerParams(
            dimension_semantics=("parallel", "arbitrary"),
            vmem_limit_bytes=_vmem_limit_bytes(tile_rows, cs, f_tile),
        ),
    )(tgt_frames, out_frames, basis)

    total = jnp.sum(partials[:, :, 0, 0])
    # Divide by the TRUE n_freq (padded lanes / padded rows contribute 0).
    return total / float(B * n_frames * n_freq)


@functools.partial(jax.jit, static_argnames=("chunk_sizes", "out_dict"))
def multiscale_spectrogram_loss(output, target, chunk_sizes, out_dict=True):
    """Equivalent of MultiscaleSpectrogramLoss(chunk_sizes)(output, target)."""
    per_scale = [_spectrogram_scale_loss(output, target, int(cs)) for cs in chunk_sizes]
    # mean over scales of (mean over batch) == mean over batch of (mean over
    # scales); this is exactly the module's 15 * mean(mean(stack(...), 0)).
    loss = 15.0 * jnp.mean(jnp.stack(per_scale))
    return {"MultiscaleSpectrogramLoss": loss} if out_dict else loss


# ------------------------- pure-JAX reference (for the self-test) ------------
def _reference_multiscale_loss(output, target, chunk_sizes):
    output = output.astype(jnp.float32)
    target = target.astype(jnp.float32)
    B, T = output.shape
    per_scale = []
    for cs in chunk_sizes:
        hop = cs // 4
        n_frames = 1 + (T - cs) // hop
        n_freq = cs // 2 + 1
        idx = np.arange(n_frames)[:, None] * hop + np.arange(cs)[None, :]
        n = np.arange(cs, dtype=np.float64)
        k = np.arange(n_freq, dtype=np.float64)
        ang = 2.0 * np.pi * np.outer(n, k) / float(cs)
        cosb = jnp.asarray(np.cos(ang), jnp.float32)
        sinb = jnp.asarray(np.sin(ang), jnp.float32)

        def mag_pow(x, cosb=cosb, sinb=sinb, idx=idx):
            fr = x[:, idx]  # (B, n_frames, cs) -- gather is fine for a reference
            re = jnp.einsum("bfc,cn->bfn", fr, cosb,
                            precision=jax.lax.Precision.HIGHEST)
            im = jnp.einsum("bfc,cn->bfn", fr, sinb,
                            precision=jax.lax.Precision.HIGHEST)
            mag = jnp.maximum(jnp.sqrt(re * re + im * im), EPS)
            return mag ** GAMMA

        d = mag_pow(target) - mag_pow(output)
        per_scale.append(jnp.mean(jnp.mean(d * d, axis=2), axis=1))  # (B,)
    loss_per_element = jnp.mean(jnp.stack(per_scale), axis=0)
    return 15.0 * jnp.mean(loss_per_element)


if __name__ == "__main__":
    key = jax.random.PRNGKey(0)
    k1, k2 = jax.random.split(key)

    B, T = 2, 1024
    chunk_sizes = (128, 256)  # n_freq = 65 / 129, n_frames = 29 / 13

    output = jax.random.normal(k1, (B, T), dtype=jnp.float32)
    target = jax.random.normal(k2, (B, T), dtype=jnp.float32)

    result = multiscale_spectrogram_loss(output, target, chunk_sizes)
    loss = jax.block_until_ready(result["MultiscaleSpectrogramLoss"])
    assert loss.shape == () and bool(jnp.isfinite(loss))

    ref = float(jax.block_until_ready(
        _reference_multiscale_loss(output, target, chunk_sizes)))
    assert abs(float(loss) - ref) <= 2e-2 * abs(ref) + 1e-5, (float(loss), ref)

    print("KERNEL_OK")
</pallas_src>

<mosaic_0001>
module attributes {stable_mosaic.version = 11 : i64} {
  func.func @_spec_loss_kernel(%arg0: i32, %arg1: i32, %arg2: memref<32x256xf32, #tpu.memory_space<vmem>>, %arg3: memref<32x256xf32, #tpu.memory_space<vmem>>, %arg4: memref<256x512xf32, #tpu.memory_space<vmem>>, %arg5: memref<1x1x8x128xf32, #tpu.memory_space<vmem>>) attributes {dimension_semantics = [#tpu.dimension_semantics<parallel>, #tpu.dimension_semantics<arbitrary>], iteration_bounds = array<i64: 1, 1>, scalar_prefetch = 0 : i64, scratch_operands = 0 : i64, tpu.core_type = #tpu.core_type<tc>, window_params = [{transform_indices = @transform_0, window_bounds = array<i64: 32, 256>}, {transform_indices = @transform_1, window_bounds = array<i64: 32, 256>}, {transform_indices = @transform_2, window_bounds = array<i64: 256, 512>}, {transform_indices = @transform_3, window_bounds = array<i64: 1, 1, 8, 128>}]} {
    %c0 = arith.constant 0 : index
    %c0_0 = arith.constant 0 : index
    %0 = vector.load %arg4[%c0, %c0_0] : memref<256x512xf32, #tpu.memory_space<vmem>>, vector<256x512xf32>
    %c0_1 = arith.constant 0 : index
    %c0_2 = arith.constant 0 : index
    %1 = vector.load %arg2[%c0_1, %c0_2] : memref<32x256xf32, #tpu.memory_space<vmem>>, vector<32x256xf32>
    %cst = arith.constant dense<0.000000e+00> : vector<32x512xf32>
    %2 = tpu.matmul %1, %0, %cst {dimension_numbers = #tpu.dot_dimension_numbers<[1], [0], [0], [1], [0, 0, 1, 1], [], []>} : vector<32x256xf32>, vector<256x512xf32>, vector<32x512xf32> -> vector<32x512xf32>
    %3 = vector.extract_strided_slice %2 {offsets = [0, 0], sizes = [32, 256], strides = [1, 1]} : vector<32x512xf32> to vector<32x256xf32>
    %4 = vector.extract_strided_slice %2 {offsets = [0, 256], sizes = [32, 256], strides = [1, 1]} : vector<32x512xf32> to vector<32x256xf32>
    %5 = arith.mulf %3, %3 : vector<32x256xf32>
    %6 = arith.mulf %4, %4 : vector<32x256xf32>
    %7 = arith.addf %5, %6 : vector<32x256xf32>
    %cst_3 = arith.constant 9.99999982E-15 : f32
    %8 = vector.broadcast %cst_3 : f32 to vector<32x256xf32>
    %9 = arith.maximumf %7, %8 : vector<32x256xf32>
    %10 = math.log %9 : vector<32x256xf32>
    %cst_4 = arith.constant 1.500000e-01 : f32
    %11 = vector.broadcast %cst_4 : f32 to vector<32x256xf32>
    %12 = arith.mulf %11, %10 : vector<32x256xf32>
    %13 = math.exp %12 : vector<32x256xf32>
    %c0_5 = arith.constant 0 : index
    %c0_6 = arith.constant 0 : index
    %14 = vector.load %arg3[%c0_5, %c0_6] : memref<32x256xf32, #tpu.memory_space<vmem>>, vector<32x256xf32>
    %cst_7 = arith.constant dense<0.000000e+00> : vector<32x512xf32>
    %15 = tpu.matmul %14, %0, %cst_7 {dimension_numbers = #tpu.dot_dimension_numbers<[1], [0], [0], [1], [0, 0, 1, 1], [], []>} : vector<32x256xf32>, vector<256x512xf32>, vector<32x512xf32> -> vector<32x512xf32>
    %16 = vector.extract_strided_slice %15 {offsets = [0, 0], sizes = [32, 256], strides = [1, 1]} : vector<32x512xf32> to vector<32x256xf32>
    %17 = vector.extract_strided_slice %15 {offsets = [0, 256], sizes = [32, 256], strides = [1, 1]} : vector<32x512xf32> to vector<32x256xf32>
    %18 = arith.mulf %16, %16 : vector<32x256xf32>
    %19 = arith.mulf %17, %17 : vector<32x256xf32>
    %20 = arith.addf %18, %19 : vector<32x256xf32>
    %cst_8 = arith.constant 9.99999982E-15 : f32
    %21 = vector.broadcast %cst_8 : f32 to vector<32x256xf32>
    %22 = arith.maximumf %20, %21 : vector<32x256xf32>
    %23 = math.log %22 : vector<32x256xf32>
    %cst_9 = arith.constant 1.500000e-01 : f32
    %24 = vector.broadcast %cst_9 : f32 to vector<32x256xf32>
    %25 = arith.mulf %24, %23 : vector<32x256xf32>
    %26 = math.exp %25 : vector<32x256xf32>
    %27 = arith.subf %13, %26 : vector<32x256xf32>
    %28 = arith.mulf %27, %27 : vector<32x256xf32>
    %29 = vector.shape_cast %28 : vector<32x256xf32> to vector<1x32x256xf32>
    %cst_10 = arith.constant dense<0.000000e+00> : vector<1xf32>
    %30 = vector.multi_reduction <add>, %29, %cst_10 [1, 2] : vector<1x32x256xf32> to vector<1xf32>
    %31 = vector.shape_cast %30 : vector<1xf32> to vector<1x1x1xf32>
    %32 = vector.extract %31[0, 0, 0] : f32 from vector<1x1x1xf32>
    %33 = vector.broadcast %32 : f32 to vector<1x1x8x128xf32>
    %c0_11 = arith.constant 0 : index
    %c0_12 = arith.constant 0 : index
    %c0_13 = arith.constant 0 : index
    %c0_14 = arith.constant 0 : index
    %34 = vector.load %arg5[%c0_11, %c0_12, %c0_13, %c0_14] : memref<1x1x8x128xf32, #tpu.memory_space<vmem>>, vector<1x1x8x128xf32>
    tpu.vector_store %arg5[%c0_11, %c0_12, %c0_13, %c0_14], %33 {strides = array<i32>} : memref<1x1x8x128xf32, #tpu.memory_space<vmem>>, vector<1x1x8x128xf32>,
    return
  }
  func.func @transform_0(%arg0: i32, %arg1: i32) -> (i32, i32) {
    %c0_i32 = arith.constant 0 : i32
    %c0_i32_0 = arith.constant 0 : i32
    return %arg0, %c0_i32 : i32, i32
  }
  func.func @transform_1(%arg0: i32, %arg1: i32) -> (i32, i32) {
    %c0_i32 = arith.constant 0 : i32
    %c0_i32_0 = arith.constant 0 : i32
    return %arg0, %c0_i32 : i32, i32
  }
  func.func @transform_2(%arg0: i32, %arg1: i32) -> (i32, i32) {
    %c0_i32 = arith.constant 0 : i32
    %c0_i32_0 = arith.constant 0 : i32
    return %c0_i32, %arg1 : i32, i32
  }
  func.func @transform_3(%arg0: i32, %arg1: i32) -> (i32, i32, i32, i32) {
    %c0_i32 = arith.constant 0 : i32
    %c0_i32_0 = arith.constant 0 : i32
    %c0_i32_1 = arith.constant 0 : i32
    return %arg0, %arg1, %c0_i32, %c0_i32_0 : i32, i32, i32, i32
  }
}

module attributes {stable_mosaic.version = 11 : i64} {
  func.func @_spec_loss_kernel(%arg0: i32, %arg1: i32, %arg2: memref<64x128xf32, #tpu.memory_space<vmem>>, %arg3: memref<64x128xf32, #tpu.memory_space<vmem>>, %arg4: memref<128x256xf32, #tpu.memory_space<vmem>>, %arg5: memref<1x1x8x128xf32, #tpu.memory_space<vmem>>) attributes {dimension_semantics = [#tpu.dimension_semantics<parallel>, #tpu.dimension_semantics<arbitrary>], iteration_bounds = array<i64: 1, 1>, scalar_prefetch = 0 : i64, scratch_operands = 0 : i64, tpu.core_type = #tpu.core_type<tc>, window_params = [{transform_indices = @transform_0, window_bounds = array<i64: 64, 128>}, {transform_indices = @transform_1, window_bounds = array<i64: 64, 128>}, {transform_indices = @transform_2, window_bounds = array<i64: 128, 256>}, {transform_indices = @transform_3, window_bounds = array<i64: 1, 1, 8, 128>}]} {
    %c0 = arith.constant 0 : index
    %c0_0 = arith.constant 0 : index
    %0 = vector.load %arg4[%c0, %c0_0] : memref<128x256xf32, #tpu.memory_space<vmem>>, vector<128x256xf32>
    %c0_1 = arith.constant 0 : index
    %c0_2 = arith.constant 0 : index
    %1 = vector.load %arg2[%c0_1, %c0_2] : memref<64x128xf32, #tpu.memory_space<vmem>>, vector<64x128xf32>
    %cst = arith.constant dense<0.000000e+00> : vector<64x256xf32>
    %2 = tpu.matmul %1, %0, %cst {dimension_numbers = #tpu.dot_dimension_numbers<[1], [0], [0], [1], [0, 0, 1, 1], [], []>} : vector<64x128xf32>, vector<128x256xf32>, vector<64x256xf32> -> vector<64x256xf32>
    %3 = vector.extract_strided_slice %2 {offsets = [0, 0], sizes = [64, 128], strides = [1, 1]} : vector<64x256xf32> to vector<64x128xf32>
    %4 = vector.extract_strided_slice %2 {offsets = [0, 128], sizes = [64, 128], strides = [1, 1]} : vector<64x256xf32> to vector<64x128xf32>
    %5 = arith.mulf %3, %3 : vector<64x128xf32>
    %6 = arith.mulf %4, %4 : vector<64x128xf32>
    %7 = arith.addf %5, %6 : vector<64x128xf32>
    %cst_3 = arith.constant 9.99999982E-15 : f32
    %8 = vector.broadcast %cst_3 : f32 to vector<64x128xf32>
    %9 = arith.maximumf %7, %8 : vector<64x128xf32>
    %10 = math.log %9 : vector<64x128xf32>
    %cst_4 = arith.constant 1.500000e-01 : f32
    %11 = vector.broadcast %cst_4 : f32 to vector<64x128xf32>
    %12 = arith.mulf %11, %10 : vector<64x128xf32>
    %13 = math.exp %12 : vector<64x128xf32>
    %c0_5 = arith.constant 0 : index
    %c0_6 = arith.constant 0 : index
    %14 = vector.load %arg3[%c0_5, %c0_6] : memref<64x128xf32, #tpu.memory_space<vmem>>, vector<64x128xf32>
    %cst_7 = arith.constant dense<0.000000e+00> : vector<64x256xf32>
    %15 = tpu.matmul %14, %0, %cst_7 {dimension_numbers = #tpu.dot_dimension_numbers<[1], [0], [0], [1], [0, 0, 1, 1], [], []>} : vector<64x128xf32>, vector<128x256xf32>, vector<64x256xf32> -> vector<64x256xf32>
    %16 = vector.extract_strided_slice %15 {offsets = [0, 0], sizes = [64, 128], strides = [1, 1]} : vector<64x256xf32> to vector<64x128xf32>
    %17 = vector.extract_strided_slice %15 {offsets = [0, 128], sizes = [64, 128], strides = [1, 1]} : vector<64x256xf32> to vector<64x128xf32>
    %18 = arith.mulf %16, %16 : vector<64x128xf32>
    %19 = arith.mulf %17, %17 : vector<64x128xf32>
    %20 = arith.addf %18, %19 : vector<64x128xf32>
    %cst_8 = arith.constant 9.99999982E-15 : f32
    %21 = vector.broadcast %cst_8 : f32 to vector<64x128xf32>
    %22 = arith.maximumf %20, %21 : vector<64x128xf32>
    %23 = math.log %22 : vector<64x128xf32>
    %cst_9 = arith.constant 1.500000e-01 : f32
    %24 = vector.broadcast %cst_9 : f32 to vector<64x128xf32>
    %25 = arith.mulf %24, %23 : vector<64x128xf32>
    %26 = math.exp %25 : vector<64x128xf32>
    %27 = arith.subf %13, %26 : vector<64x128xf32>
    %28 = arith.mulf %27, %27 : vector<64x128xf32>
    %29 = vector.shape_cast %28 : vector<64x128xf32> to vector<1x64x128xf32>
    %cst_10 = arith.constant dense<0.000000e+00> : vector<1xf32>
    %30 = vector.multi_reduction <add>, %29, %cst_10 [1, 2] : vector<1x64x128xf32> to vector<1xf32>
    %31 = vector.shape_cast %30 : vector<1xf32> to vector<1x1x1xf32>
    %32 = vector.extract %31[0, 0, 0] : f32 from vector<1x1x1xf32>
    %33 = vector.broadcast %32 : f32 to vector<1x1x8x128xf32>
    %c0_11 = arith.constant 0 : index
    %c0_12 = arith.constant 0 : index
    %c0_13 = arith.constant 0 : index
    %c0_14 = arith.constant 0 : index
    %34 = vector.load %arg5[%c0_11, %c0_12, %c0_13, %c0_14] : memref<1x1x8x128xf32, #tpu.memory_space<vmem>>, vector<1x1x8x128xf32>
    tpu.vector_store %arg5[%c0_11, %c0_12, %c0_13, %c0_14], %33 {strides = array<i32>} : memref<1x1x8x128xf32, #tpu.memory_space<vmem>>, vector<1x1x8x128xf32>,
    return
  }
  func.func @transform_0(%arg0: i32, %arg1: i32) -> (i32, i32) {
    %c0_i32 = arith.constant 0 : i32
    %c0_i32_0 = arith.constant 0 : i32
    return %arg0, %c0_i32 : i32, i32
  }
  func.func @transform_1(%arg0: i32, %arg1: i32) -> (i32, i32) {
    %c0_i32 = arith.constant 0 : i32
    %c0_i32_0 = arith.constant 0 : i32
    return %arg0, %c0_i32 : i32, i32
  }
  func.func @transform_2(%arg0: i32, %arg1: i32) -> (i32, i32) {
    %c0_i32 = arith.constant 0 : i32
    %c0_i32_0 = arith.constant 0 : i32
    return %c0_i32, %arg1 : i32, i32
  }
  func.func @transform_3(%arg0: i32, %arg1: i32) -> (i32, i32, i32, i32) {
    %c0_i32 = arith.constant 0 : i32
    %c0_i32_0 = arith.constant 0 : i32
    %c0_i32_1 = arith.constant 0 : i32
    return %arg0, %arg1, %c0_i32, %c0_i32_0 : i32, i32, i32, i32
  }
}

</mosaic_0001>

<llo_original>
// kernel: multiscale_spectrogram_loss.2
$region0: #{multiscale_spectrogram_loss.2}
  #allocation0 [shape = 'u32[]', space=smem, size = 0x4, offset = 0x4, fixed_abs, tag = 'smem constant byte address 0x4 - core index']
  #allocation1 [shape = 'u32[144,128]{1,0:T(1,128)}', space=vmem, size = 0x12000, scoped, tag = 'internal scratch']
  %s0 = inlined_call_operand.vmem [shape: f32[64,128], index: 0, kind: input, shape index: {}]
  %s1 = inlined_call_operand.vmem [shape: f32[64,128], index: 1, kind: input, shape index: {}]
  %s2 = inlined_call_operand.vmem [shape: f32[128,256], index: 2, kind: input, shape index: {}]
  %s3 = inlined_call_operand.vmem [shape: f32[1,1,8,128], index: 3, kind: output, shape index: {}]
  %s4 = sld [smem:[#allocation0]]
  $region22: #{multiscale_spectrogram_loss.2} parent=0
    _
  %s6 = ssub.s32 1, %s4
  %s7 = scalar_select 0, %s6, %s4
  // Predicated region
  $region2: #{multiscale_spectrogram_loss.2} parent=0 // pred_check
    _
  $region3: #{multiscale_spectrogram_loss.2} parent=0 // pred_check_branch
    %9 = sbr.rel (0) target = $region5
  $region4: #{multiscale_spectrogram_loss.2} parent=0 // pred_region
    _
  $region5: #{multiscale_spectrogram_loss.2} parent=0 // pred_fallthru
    _
  // Predicated region
  $region6: #{multiscale_spectrogram_loss.2} parent=0 // pred_check
    _
  $region7: #{multiscale_spectrogram_loss.2} parent=0 // pred_check_branch
    %11 = sbr.rel (0) target = $region9
  $region8: #{multiscale_spectrogram_loss.2} parent=0 // pred_region
    _
  $region9: #{multiscale_spectrogram_loss.2} parent=0 // pred_fallthru
    _
  // Predicated region
  $region10: #{multiscale_spectrogram_loss.2} parent=0 // pred_check
    _
  $region11: #{multiscale_spectrogram_loss.2} parent=0 // pred_check_branch
    %13 = sbr.rel (0) target = $region13
  $region12: #{multiscale_spectrogram_loss.2} parent=0 // pred_region
    _
  $region13: #{multiscale_spectrogram_loss.2} parent=0 // pred_fallthru
    _
  %v14 = vld [vmem:[%s2] sm:$0xff]
  %v15 = vld [vmem:[%s2 + $0x8] sm:$0xff]
  %v16 = vld [vmem:[%s2 + $0x10] sm:$0xff]
  %v17 = vld [vmem:[%s2 + $0x18] sm:$0xff]
  %v18 = vld [vmem:[%s2 + $0x20] sm:$0xff]
  %v19 = vld [vmem:[%s2 + $0x28] sm:$0xff]
  %v20 = vld [vmem:[%s2 + $0x30] sm:$0xff]
  %v21 = vld [vmem:[%s2 + $0x38] sm:$0xff]
  %v22 = vld [vmem:[%s2 + $0x40] sm:$0xff]
  %v23 = vld [vmem:[%s2 + $0x48] sm:$0xff]
  %v24 = vld [vmem:[%s2 + $0x50] sm:$0xff]
  %v25 = vld [vmem:[%s2 + $0x58] sm:$0xff]
  %v26 = vld [vmem:[%s2 + $0x60] sm:$0xff]
  %v27 = vld [vmem:[%s2 + $0x68] sm:$0xff]
  %v28 = vld [vmem:[%s2 + $0x70] sm:$0xff]
  %v29 = vld [vmem:[%s2 + $0x78] sm:$0xff]
  %v30 = vld [vmem:[%s2 + $0x80] sm:$0xff]
  %v31 = vld [vmem:[%s2 + $0x88] sm:$0xff]
  %v32 = vld [vmem:[%s2 + $0x90] sm:$0xff]
  %v33 = vld [vmem:[%s2 + $0x98] sm:$0xff]
  %v34 = vld [vmem:[%s2 + $0xa0] sm:$0xff]
  %v35 = vld [vmem:[%s2 + $0xa8] sm:$0xff]
  %v36 = vld [vmem:[%s2 + $0xb0] sm:$0xff]
  %v37 = vld [vmem:[%s2 + $0xb8] sm:$0xff]
  %v38 = vld [vmem:[%s2 + $0xc0] sm:$0xff]
  %v39 = vld [vmem:[%s2 + $0xc8] sm:$0xff]
  %v40 = vld [vmem:[%s2 + $0xd0] sm:$0xff]
  %v41 = vld [vmem:[%s2 + $0xd8] sm:$0xff]
  %v42 = vld [vmem:[%s2 + $0xe0] sm:$0xff]
  %v43 = vld [vmem:[%s2 + $0xe8] sm:$0xff]
  %v44 = vld [vmem:[%s2 + $0xf0] sm:$0xff]
  %v45 = vld [vmem:[%s2 + $0xf8] sm:$0xff]
  %v46 = vld [vmem:[%s0] sm:$0xff]
  %v47 = vld [vmem:[%s0 + $0x8] sm:$0xff]
  %v48 = vld [vmem:[%s0 + $0x10] sm:$0xff]
  %v49 = vld [vmem:[%s0 + $0x18] sm:$0xff]
  %v50 = vld [vmem:[%s0 + $0x20] sm:$0xff]
  %v51 = vld [vmem:[%s0 + $0x28] sm:$0xff]
  %v52 = vld [vmem:[%s0 + $0x30] sm:$0xff]
  %v53 = vld [vmem:[%s0 + $0x38] sm:$0xff]
  %54 = vmatprep.subr.mxu0 %v15
  %55 = vmatpush1.msra.mxu0 %v14
  %56 = vmatprep.subr.mxu0 %v17
  %57 = vmatpush1.msra.mxu0 %v16
  %58 = vmatprep.subr.mxu0 %v19
  %59 = vmatpush1.msra.mxu0 %v18
  %60 = vmatprep.subr.mxu0 %v21
  %61 = vmatpush1.msra.mxu0 %v20
  %62 = vmatprep.subr.mxu0 %v23
  %63 = vmatpush1.msra.mxu0 %v22
  %64 = vmatprep.subr.mxu0 %v25
  %65 = vmatpush1.msra.mxu0 %v24
  %66 = vmatprep.subr.mxu0 %v27
  %67 = vmatpush1.msra.mxu0 %v26
  %68 = vmatprep.subr.mxu0 %v29
  %69 = vmatpush1.msra.mxu0 %v28
  %70 = vmatprep.subr.mxu0 %v31
  %71 = vmatpush1.msra.mxu0 %v30
  %72 = vmatprep.subr.mxu0 %v33
  %73 = vmatpush1.msra.mxu0 %v32
  %74 = vmatprep.subr.mxu0 %v35
  %75 = vmatpush1.msra.mxu0 %v34
  %76 = vmatprep.subr.mxu0 %v37
  %77 = vmatpush1.msra.mxu0 %v36
  %78 = vmatprep.subr.mxu0 %v39
  %79 = vmatpush1.msra.mxu0 %v38
  %80 = vmatprep.subr.mxu0 %v41
  %81 = vmatpush1.msra.mxu0 %v40
  %82 = vmatprep.subr.mxu0 %v43
  %83 = vmatpush1.msra.mxu0 %v42
  %84 = vmatprep.subr.mxu0 %v45
  %85 = vmatpush1.msra.mxu0 %v44
  %86 = vmatprep.subr.mxu0 0.0
  %87 = vmatpush1.msra.mxu0 0.0
  %88 = vmatprep.subr.mxu0 0.0
  %89 = vmatpush1.msra.mxu0 0.0
  %90 = vmatprep.subr.mxu0 0.0
  %91 = vmatpush1.msra.mxu0 0.0
  %92 = vmatprep.subr.mxu0 0.0
  %93 = vmatpush1.msra.mxu0 0.0
  %94 = vmatprep.subr.mxu0 0.0
  %95 = vmatpush1.msra.mxu0 0.0
  %96 = vmatprep.subr.mxu0 0.0
  %97 = vmatpush1.msra.mxu0 0.0
  %98 = vmatprep.subr.mxu0 0.0
  %99 = vmatpush1.msra.mxu0 0.0
  %100 = vmatprep.subr.mxu0 0.0
  %101 = vmatpush1.msra.mxu0 0.0
  %102 = vmatprep.subr.mxu0 0.0
  %103 = vmatpush1.msra.mxu0 0.0
  %104 = vmatprep.subr.mxu0 0.0
  %105 = vmatpush1.msra.mxu0 0.0
  %106 = vmatprep.subr.mxu0 0.0
  %107 = vmatpush1.msra.mxu0 0.0
  %108 = vmatprep.subr.mxu0 0.0
  %109 = vmatpush1.msra.mxu0 0.0
  %110 = vmatprep.subr.mxu0 0.0
  %111 = vmatpush1.msra.mxu0 0.0
  %112 = vmatprep.subr.mxu0 0.0
  %113 = vmatpush1.msra.mxu0 0.0
  %114 = vmatprep.subr.mxu0 0.0
  %115 = vmatpush1.msra.mxu0 0.0
  %116 = vmatprep.subr.mxu0 0.0
  %117 = vmatpush1.msra.mxu0 0.0
  %118 = vmatprep.mubr.f32.mxu0 0.0
  %119 = vmatmul.mubr.f32.gmra.mrb[0].mxu0 %v46
  %v120 = vpop.f32.mrb[0].mxu0
  %v121 = vadd.f32 0.0, %v120
  %v122 = vpop.f32.mrb[0].mxu0
  %v123 = vadd.f32 0.0, %v122
  %124 = vmatprep.mubr.f32.mxu0 0.0
  %125 = vmatmul.mubr.f32.gmra.mrb[0].mxu0 %v47
  %v126 = vpop.f32.mrb[0].mxu0
  %v127 = vadd.f32 0.0, %v126
  %v128 = vpop.f32.mrb[0].mxu0
  %v129 = vadd.f32 0.0, %v128
  %130 = vmatprep.mubr.f32.mxu0 0.0
  %131 = vmatmul.mubr.f32.gmra.mrb[0].mxu0 %v48
  %v132 = vpop.f32.mrb[0].mxu0
  %v133 = vadd.f32 0.0, %v132
  %v134 = vpop.f32.mrb[0].mxu0
  %v135 = vadd.f32 0.0, %v134
  %136 = vmatprep.mubr.f32.mxu0 0.0
  %137 = vmatmul.mubr.f32.gmra.mrb[0].mxu0 %v49
  %v138 = vpop.f32.mrb[0].mxu0
  %v139 = vadd.f32 0.0, %v138
  %v140 = vpop.f32.mrb[0].mxu0
  %v141 = vadd.f32 0.0, %v140
  %142 = vmatprep.mubr.f32.mxu0 0.0
  %143 = vmatmul.mubr.f32.gmra.mrb[0].mxu0 %v50
  %v144 = vpop.f32.mrb[0].mxu0
  %v145 = vadd.f32 0.0, %v144
  %v146 = vpop.f32.mrb[0].mxu0
  %v147 = vadd.f32 0.0, %v146
  %148 = vmatprep.mubr.f32.mxu0 0.0
  %149 = vmatmul.mubr.f32.gmra.mrb[0].mxu0 %v51
  %v150 = vpop.f32.mrb[0].mxu0
  %v151 = vadd.f32 0.0, %v150
  %v152 = vpop.f32.mrb[0].mxu0
  %v153 = vadd.f32 0.0, %v152
  %154 = vmatprep.mubr.f32.mxu0 0.0
  %155 = vmatmul.mubr.f32.gmra.mrb[0].mxu0 %v52
  %v156 = vpop.f32.mrb[0].mxu0
  %v157 = vadd.f32 0.0, %v156
  %v158 = vpop.f32.mrb[0].mxu0
  %v159 = vadd.f32 0.0, %v158
  %160 = vmatprep.mubr.f32.mxu0 0.0
  %161 = vmatmul.mubr.f32.gmra.mrb[0].mxu0 %v53
  %v162 = vpop.f32.mrb[0].mxu0
  %v163 = vadd.f32 0.0, %v162
  %v164 = vpop.f32.mrb[0].mxu0
  %v165 = vadd.f32 0.0, %v164
  %166 = vdwg.mxu0
  %v167 = vmul.f32 %v121, %v121
  %v168 = vmul.f32 %v127, %v127
  %v169 = vmul.f32 %v133, %v133
  %v170 = vmul.f32 %v139, %v139
  %v171 = vmul.f32 %v145, %v145
  %v172 = vmul.f32 %v151, %v151
  %v173 = vmul.f32 %v157, %v157
  %v174 = vmul.f32 %v163, %v163
  %v175 = vmul.f32 %v123, %v123
  %v176 = vmul.f32 %v129, %v129
  %v177 = vmul.f32 %v135, %v135
  %v178 = vmul.f32 %v141, %v141
  %v179 = vmul.f32 %v147, %v147
  %v180 = vmul.f32 %v153, %v153
  %v181 = vmul.f32 %v159, %v159
  %v182 = vmul.f32 %v165, %v165
  %v183 = vadd.f32 %v167, %v175
  %v184 = vadd.f32 %v168, %v176
  %v185 = vadd.f32 %v169, %v177
  %v186 = vadd.f32 %v170, %v178
  %v187 = vadd.f32 %v171, %v179
  %v188 = vadd.f32 %v172, %v180
  %v189 = vadd.f32 %v173, %v181
  %v190 = vadd.f32 %v174, %v182
  %v191 = vmax.f32 %v183, 1e-14
  %v192 = vmax.f32 %v184, 1e-14
  %v193 = vmax.f32 %v185, 1e-14
  %v194 = vmax.f32 %v186, 1e-14
  %v195 = vmax.f32 %v187, 1e-14
  %v196 = vmax.f32 %v188, 1e-14
  %v197 = vmax.f32 %v189, 1e-14
  %v198 = vmax.f32 %v190, 1e-14
  %v199 = vlog2.pop %v191
  %v200 = vmul.f32 %v199, 0.6931472
  %v201 = vlog2.pop %v192
  %v202 = vmul.f32 %v201, 0.6931472
  %v203 = vlog2.pop %v193
  %v204 = vmul.f32 %v203, 0.6931472
  %v205 = vlog2.pop %v194
  %v206 = vmul.f32 %v205, 0.6931472
  %v207 = vlog2.pop %v195
  %v208 = vmul.f32 %v207, 0.6931472
  %v209 = vlog2.pop %v196
  %v210 = vmul.f32 %v209, 0.6931472
  %v211 = vlog2.pop %v197
  %v212 = vmul.f32 %v211, 0.6931472
  %v213 = vlog2.pop %v198
  %v214 = vmul.f32 %v213, 0.6931472
  %v215 = vmul.f32 %v200, 0.15
  %v216 = vmul.f32 %v202, 0.15
  %v217 = vmul.f32 %v204, 0.15
  %v218 = vmul.f32 %v206, 0.15
  %v219 = vmul.f32 %v208, 0.15
  %v220 = vmul.f32 %v210, 0.15
  %v221 = vmul.f32 %v212, 0.15
  %v222 = vmul.f32 %v214, 0.15
  %v223 = vmul.f32 %v215, 1.442695
  %v224 = vpow.pop %v223
  %v225 = vmul.f32 %v216, 1.442695
  %v226 = vpow.pop %v225
  %v227 = vmul.f32 %v217, 1.442695
  %v228 = vpow.pop %v227
  %v229 = vmul.f32 %v218, 1.442695
  %v230 = vpow.pop %v229
  %v231 = vmul.f32 %v219, 1.442695
  %v232 = vpow.pop %v231
  %v233 = vmul.f32 %v220, 1.442695
  %v234 = vpow.pop %v233
  %v235 = vmul.f32 %v221, 1.442695
  %v236 = vpow.pop %v235
  %v237 = vmul.f32 %v222, 1.442695
  %v238 = vpow.pop %v237
  %v239 = vld [vmem:[%s1] sm:$0xff]
  %v240 = vld [vmem:[%s1 + $0x8] sm:$0xff]
  %v241 = vld [vmem:[%s1 + $0x10] sm:$0xff]
  %v242 = vld [vmem:[%s1 + $0x18] sm:$0xff]
  %v243 = vld [vmem:[%s1 + $0x20] sm:$0xff]
  %v244 = vld [vmem:[%s1 + $0x28] sm:$0xff]
  %v245 = vld [vmem:[%s1 + $0x30] sm:$0xff]
  %v246 = vld [vmem:[%s1 + $0x38] sm:$0xff]
  %247 = vmatprep.subr.mxu0 %v15
  %248 = vmatpush1.msra.mxu0 %v14
  %249 = vmatprep.subr.mxu0 %v17
  %250 = vmatpush1.msra.mxu0 %v16
  %251 = vmatprep.subr.mxu0 %v19
  %252 = vmatpush1.msra.mxu0 %v18
  %253 = vmatprep.subr.mxu0 %v21
  %254 = vmatpush1.msra.mxu0 %v20
  %255 = vmatprep.subr.mxu0 %v23
  %256 = vmatpush1.msra.mxu0 %v22
  %257 = vmatprep.subr.mxu0 %v25
  %258 = vmatpush1.msra.mxu0 %v24
  %259 = vmatprep.subr.mxu0 %v27
  %260 = vmatpush1.msra.mxu0 %v26
  %261 = vmatprep.subr.mxu0 %v29
  %262 = vmatpush1.msra.mxu0 %v28
  %263 = vmatprep.subr.mxu0 %v31
  %264 = vmatpush1.msra.mxu0 %v30
  %265 = vmatprep.subr.mxu0 %v33
  %266 = vmatpush1.msra.mxu0 %v32
  %267 = vmatprep.subr.mxu0 %v35
  %268 = vmatpush1.msra.mxu0 %v34
  %269 = vmatprep.subr.mxu0 %v37
  %270 = vmatpush1.msra.mxu0 %v36
  %271 = vmatprep.subr.mxu0 %v39
  %272 = vmatpush1.msra.mxu0 %v38
  %273 = vmatprep.subr.mxu0 %v41
  %274 = vmatpush1.msra.mxu0 %v40
  %275 = vmatprep.subr.mxu0 %v43
  %276 = vmatpush1.msra.mxu0 %v42
  %277 = vmatprep.subr.mxu0 %v45
  %278 = vmatpush1.msra.mxu0 %v44
  %279 = vmatprep.subr.mxu0 0.0
  %280 = vmatpush1.msra.mxu0 0.0
  %281 = vmatprep.subr.mxu0 0.0
  %282 = vmatpush1.msra.mxu0 0.0
  %283 = vmatprep.subr.mxu0 0.0
  %284 = vmatpush1.msra.mxu0 0.0
  %285 = vmatprep.subr.mxu0 0.0
  %286 = vmatpush1.msra.mxu0 0.0
  %287 = vmatprep.subr.mxu0 0.0
  %288 = vmatpush1.msra.mxu0 0.0
  %289 = vmatprep.subr.mxu0 0.0
  %290 = vmatpush1.msra.mxu0 0.0
  %291 = vmatprep.subr.mxu0 0.0
  %292 = vmatpush1.msra.mxu0 0.0
  %293 = vmatprep.subr.mxu0 0.0
  %294 = vmatpush1.msra.mxu0 0.0
  %295 = vmatprep.subr.mxu0 0.0
  %296 = vmatpush1.msra.mxu0 0.0
  %297 = vmatprep.subr.mxu0 0.0
  %298 = vmatpush1.msra.mxu0 0.0
  %299 = vmatprep.subr.mxu0 0.0
  %300 = vmatpush1.msra.mxu0 0.0
  %301 = vmatprep.subr.mxu0 0.0
  %302 = vmatpush1.msra.mxu0 0.0
  %303 = vmatprep.subr.mxu0 0.0
  %304 = vmatpush1.msra.mxu0 0.0
  %305 = vmatprep.subr.mxu0 0.0
  %306 = vmatpush1.msra.mxu0 0.0
  %307 = vmatprep.subr.mxu0 0.0
  %308 = vmatpush1.msra.mxu0 0.0
  %309 = vmatprep.subr.mxu0 0.0
  %310 = vmatpush1.msra.mxu0 0.0
  %311 = vmatprep.mubr.f32.mxu0 0.0
  %312 = vmatmul.mubr.f32.gmra.mrb[0].mxu0 %v239
  %v313 = vpop.f32.mrb[0].mxu0
  %v314 = vadd.f32 0.0, %v313
  %v315 = vpop.f32.mrb[0].mxu0
  %v316 = vadd.f32 0.0, %v315
  %317 = vmatprep.mubr.f32.mxu0 0.0
  %318 = vmatmul.mubr.f32.gmra.mrb[0].mxu0 %v240
  %v319 = vpop.f32.mrb[0].mxu0
  %v320 = vadd.f32 0.0, %v319
  %v321 = vpop.f32.mrb[0].mxu0
  %v322 = vadd.f32 0.0, %v321
  %323 = vmatprep.mubr.f32.mxu0 0.0
  %324 = vmatmul.mubr.f32.gmra.mrb[0].mxu0 %v241
  %v325 = vpop.f32.mrb[0].mxu0
  %v326 = vadd.f32 0.0, %v325
  %v327 = vpop.f32.mrb[0].mxu0
  %v328 = vadd.f32 0.0, %v327
  %329 = vmatprep.mubr.f32.mxu0 0.0
  %330 = vmatmul.mubr.f32.gmra.mrb[0].mxu0 %v242
  %v331 = vpop.f32.mrb[0].mxu0
  %v332 = vadd.f32 0.0, %v331
  %v333 = vpop.f32.mrb[0].mxu0
  %v334 = vadd.f32 0.0, %v333
  %335 = vmatprep.mubr.f32.mxu0 0.0
  %336 = vmatmul.mubr.f32.gmra.mrb[0].mxu0 %v243
  %v337 = vpop.f32.mrb[0].mxu0
  %v338 = vadd.f32 0.0, %v337
  %v339 = vpop.f32.mrb[0].mxu0
  %v340 = vadd.f32 0.0, %v339
  %341 = vmatprep.mubr.f32.mxu0 0.0
  %342 = vmatmul.mubr.f32.gmra.mrb[0].mxu0 %v244
  %v343 = vpop.f32.mrb[0].mxu0
  %v344 = vadd.f32 0.0, %v343
  %v345 = vpop.f32.mrb[0].mxu0
  %v346 = vadd.f32 0.0, %v345
  %347 = vmatprep.mubr.f32.mxu0 0.0
  %348 = vmatmul.mubr.f32.gmra.mrb[0].mxu0 %v245
  %v349 = vpop.f32.mrb[0].mxu0
  %v350 = vadd.f32 0.0, %v349
  %v351 = vpop.f32.mrb[0].mxu0
  %v352 = vadd.f32 0.0, %v351
  %353 = vmatprep.mubr.f32.mxu0 0.0
  %354 = vmatmul.mubr.f32.gmra.mrb[0].mxu0 %v246
  %v355 = vpop.f32.mrb[0].mxu0
  %v356 = vadd.f32 0.0, %v355
  %v357 = vpop.f32.mrb[0].mxu0
  %v358 = vadd.f32 0.0, %v357
  %359 = vdwg.mxu0
  %v360 = vmul.f32 %v314, %v314
  %v361 = vmul.f32 %v320, %v320
  %v362 = vmul.f32 %v326, %v326
  %v363 = vmul.f32 %v332, %v332
  %v364 = vmul.f32 %v338, %v338
  %v365 = vmul.f32 %v344, %v344
  %v366 = vmul.f32 %v350, %v350
  %v367 = vmul.f32 %v356, %v356
  %v368 = vmul.f32 %v316, %v316
  %v369 = vmul.f32 %v322, %v322
  %v370 = vmul.f32 %v328, %v328
  %v371 = vmul.f32 %v334, %v334
  %v372 = vmul.f32 %v340, %v340
  %v373 = vmul.f32 %v346, %v346
  %v374 = vmul.f32 %v352, %v352
  %v375 = vmul.f32 %v358, %v358
  %v376 = vadd.f32 %v360, %v368
  %v377 = vadd.f32 %v361, %v369
  %v378 = vadd.f32 %v362, %v370
  %v379 = vadd.f32 %v363, %v371
  %v380 = vadd.f32 %v364, %v372
  %v381 = vadd.f32 %v365, %v373
  %v382 = vadd.f32 %v366, %v374
  %v383 = vadd.f32 %v367, %v375
  %v384 = vmax.f32 %v376, 1e-14
  %v385 = vmax.f32 %v377, 1e-14
  %v386 = vmax.f32 %v378, 1e-14
  %v387 = vmax.f32 %v379, 1e-14
  %v388 = vmax.f32 %v380, 1e-14
  %v389 = vmax.f32 %v381, 1e-14
  %v390 = vmax.f32 %v382, 1e-14
  %v391 = vmax.f32 %v383, 1e-14
  %v392 = vlog2.pop %v384
  %v393 = vmul.f32 %v392, 0.6931472
  %v394 = vlog2.pop %v385
  %v395 = vmul.f32 %v394, 0.6931472
  %v396 = vlog2.pop %v386
  %v397 = vmul.f32 %v396, 0.6931472
  %v398 = vlog2.pop %v387
  %v399 = vmul.f32 %v398, 0.6931472
  %v400 = vlog2.pop %v388
  %v401 = vmul.f32 %v400, 0.6931472
  %v402 = vlog2.pop %v389
  %v403 = vmul.f32 %v402, 0.6931472
  %v404 = vlog2.pop %v390
  %v405 = vmul.f32 %v404, 0.6931472
  %v406 = vlog2.pop %v391
  %v407 = vmul.f32 %v406, 0.6931472
  %v408 = vmul.f32 %v393, 0.15
  %v409 = vmul.f32 %v395, 0.15
  %v410 = vmul.f32 %v397, 0.15
  %v411 = vmul.f32 %v399, 0.15
  %v412 = vmul.f32 %v401, 0.15
  %v413 = vmul.f32 %v403, 0.15
  %v414 = vmul.f32 %v405, 0.15
  %v415 = vmul.f32 %v407, 0.15
  %v416 = vmul.f32 %v408, 1.442695
  %v417 = vpow.pop %v416
  %v418 = vmul.f32 %v409, 1.442695
  %v419 = vpow.pop %v418
  %v420 = vmul.f32 %v410, 1.442695
  %v421 = vpow.pop %v420
  %v422 = vmul.f32 %v411, 1.442695
  %v423 = vpow.pop %v422
  %v424 = vmul.f32 %v412, 1.442695
  %v425 = vpow.pop %v424
  %v426 = vmul.f32 %v413, 1.442695
  %v427 = vpow.pop %v426
  %v428 = vmul.f32 %v414, 1.442695
  %v429 = vpow.pop %v428
  %v430 = vmul.f32 %v415, 1.442695
  %v431 = vpow.pop %v430
  %v432 = vsub.f32 %v224, %v417
  %v433 = vsub.f32 %v226, %v419
  %v434 = vsub.f32 %v228, %v421
  %v435 = vsub.f32 %v230, %v423
  %v436 = vsub.f32 %v232, %v425
  %v437 = vsub.f32 %v234, %v427
  %v438 = vsub.f32 %v236, %v429
  %v439 = vsub.f32 %v238, %v431
  %v440 = vmul.f32 %v432, %v432
  %v441 = vmul.f32 %v433, %v433
  %v442 = vmul.f32 %v434, %v434
  %v443 = vmul.f32 %v435, %v435
  %v444 = vmul.f32 %v436, %v436
  %v445 = vmul.f32 %v437, %v437
  %v446 = vmul.f32 %v438, %v438
  %v447 = vmul.f32 %v439, %v439
  %v448 = vadd.f32 %v440, %v441
  %v449 = vadd.f32 %v448, %v442
  %v450 = vadd.f32 %v449, %v443
  %v451 = vadd.f32 %v450, %v444
  %v452 = vadd.f32 %v451, %v445
  %v453 = vadd.f32 %v452, %v446
  %v454 = vadd.f32 %v453, %v447
  %455 = vadd.xlane.f32.xlu0 %v454
  %v456 = vpop.xlane.xlu0 %455
  %v457 = vrot.slane %v456, 4
  %v458 = vadd.f32 %v456, %v457
  %v459 = vrot.slane %v458, 2
  %v460 = vadd.f32 %v458, %v459
  %v461 = vrot.slane %v460, 1
  %v462 = vadd.f32 %v460, %v461
  %s463 = vtos %v462
  %v464 = vstv %s463
  %465 = vst [vmem:[%s3] sm:$0xff] %v464
  // Predicated region
  $region14: #{multiscale_spectrogram_loss.2} parent=0 // pred_check
    _
  $region15: #{multiscale_spectrogram_loss.2} parent=0 // pred_check_branch
    %467 = sbr.rel (0) target = $region17
  $region16: #{multiscale_spectrogram_loss.2} parent=0 // pred_region
    _
  $region17: #{multiscale_spectrogram_loss.2} parent=0 // pred_fallthru
    _
  // Predicated region
  $region18: #{multiscale_spectrogram_loss.2} parent=0 // pred_check
    _
  $region19: #{multiscale_spectrogram_loss.2} parent=0 // pred_check_branch
    %469 = sbr.rel (0) target = $region21
  $region20: #{multiscale_spectrogram_loss.2} parent=0 // pred_region
    _
  $region21: #{multiscale_spectrogram_loss.2} parent=0 // pred_fallthru
    _

// kernel: multiscale_spectrogram_loss.3
$region0: #{multiscale_spectrogram_loss.3}
  #allocation0 [shape = 'u32[]', space=smem, size = 0x4, offset = 0x4, fixed_abs, tag = 'smem constant byte address 0x4 - core index']
  #allocation1 [shape = 'u32[144,128]{1,0:T(1,128)}', space=vmem, size = 0x12000, scoped, tag = 'internal scratch']
  %s0 = inlined_call_operand.vmem [shape: f32[32,256], index: 0, kind: input, shape index: {}]
  %s1 = inlined_call_operand.vmem [shape: f32[32,256], index: 1, kind: input, shape index: {}]
  %s2 = inlined_call_operand.hbm [shape: f32[256,512], index: 2, kind: input, shape index: {}]
  %s3 = inlined_call_operand.vmem [shape: f32[1,1,8,128], index: 3, kind: output, shape index: {}]
  %s4 = sld [smem:[#allocation0]]
  $region26: #{multiscale_spectrogram_loss.3} parent=0
    _
  %s6 = ssub.s32 1, %s4
  %s7 = scalar_select 0, %s6, %s4
  $region1: #{multiscale_spectrogram_loss.3} parent=0
    #allocation2 [shape = 'u8[524288]{0}', space=vmem, size = 0x80000, scoped, tag = 'input window, operand 2, single buffered']
    #allocation3 [shape = 's32[1]{0}', space=sflag, size = 0x4, scoped, tag = 'scoped memory for multiscale_spectrogram_loss.3']
    %8 = vsyncpa [#allocation3], 0
    // Predicated region
    $region2: #{multiscale_spectrogram_loss.3} parent=1 // pred_check
      _
    $region3: #{multiscale_spectrogram_loss.3} parent=1 // pred_check_branch
      %10 = sbr.rel (0) target = $region5
    $region4: #{multiscale_spectrogram_loss.3} parent=1 // pred_region
      _
    $region5: #{multiscale_spectrogram_loss.3} parent=1 // pred_fallthru
      _
    // Predicated region
    $region6: #{multiscale_spectrogram_loss.3} parent=1 // pred_check
      _
    $region7: #{multiscale_spectrogram_loss.3} parent=1 // pred_check_branch
      %12 = sbr.rel (0) target = $region9
    $region8: #{multiscale_spectrogram_loss.3} parent=1 // pred_region
      _
    $region9: #{multiscale_spectrogram_loss.3} parent=1 // pred_fallthru
      _
    // Predicated region
    $region10: #{multiscale_spectrogram_loss.3} parent=1 // pred_check
      _
    $region11: #{multiscale_spectrogram_loss.3} parent=1 // pred_check_branch
      %14 = sbr.rel (0) target = $region13
    $region12: #{multiscale_spectrogram_loss.3} parent=1 // pred_region
      %s16 = ssub.s32 16384, 16384
      %17 = vsyncadd [#allocation3], %s16
      %s18 = sshll.u32 [#allocation2], 4
      %s19 = int_to_ptr.vmem [resolvable:$true] %s18
      %24 = dma.hbm_to_vmem [thread:$0]  %s2, 16384, %s19, [#allocation3], 512, 512, 32
    $region13: #{multiscale_spectrogram_loss.3} parent=1 // pred_fallthru
      _
    // Predicated region
    $region14: #{multiscale_spectrogram_loss.3} parent=1 // pred_check
      _
    $region15: #{multiscale_spectrogram_loss.3} parent=1 // pred_check_branch
      %26 = sbr.rel (0) target = $region17
    $region16: #{multiscale_spectrogram_loss.3} parent=1 // pred_region
      %27 = dma.done [#allocation3], 16384
    $region17: #{multiscale_spectrogram_loss.3} parent=1 // pred_fallthru
      _
    %v28 = vld [vmem:[#allocation2] sm:$0xff]
    %v29 = vld [vmem:[#allocation2 + $0x8] sm:$0xff]
    %v30 = vld [vmem:[#allocation2 + $0x10] sm:$0xff]
    %v31 = vld [vmem:[#allocation2 + $0x18] sm:$0xff]
    %v32 = vld [vmem:[#allocation2 + $0x20] sm:$0xff]
    %v33 = vld [vmem:[#allocation2 + $0x28] sm:$0xff]
    %v34 = vld [vmem:[#allocation2 + $0x30] sm:$0xff]
    %v35 = vld [vmem:[#allocation2 + $0x38] sm:$0xff]
    %v36 = vld [vmem:[#allocation2 + $0x40] sm:$0xff]
    %v37 = vld [vmem:[#allocation2 + $0x48] sm:$0xff]
    %v38 = vld [vmem:[#allocation2 + $0x50] sm:$0xff]
    %v39 = vld [vmem:[#allocation2 + $0x58] sm:$0xff]
    %v40 = vld [vmem:[#allocation2 + $0x60] sm:$0xff]
    %v41 = vld [vmem:[#allocation2 + $0x68] sm:$0xff]
    %v42 = vld [vmem:[#allocation2 + $0x70] sm:$0xff]
    %v43 = vld [vmem:[#allocation2 + $0x78] sm:$0xff]
    %v44 = vld [vmem:[#allocation2 + $0x80] sm:$0xff]
    %v45 = vld [vmem:[#allocation2 + $0x88] sm:$0xff]
    %v46 = vld [vmem:[#allocation2 + $0x90] sm:$0xff]
    %v47 = vld [vmem:[#allocation2 + $0x98] sm:$0xff]
    %v48 = vld [vmem:[#allocation2 + $0xa0] sm:$0xff]
    %v49 = vld [vmem:[#allocation2 + $0xa8] sm:$0xff]
    %v50 = vld [vmem:[#allocation2 + $0xb0] sm:$0xff]
    %v51 = vld [vmem:[#allocation2 + $0xb8] sm:$0xff]
    %v52 = vld [vmem:[#allocation2 + $0xc0] sm:$0xff]
    %v53 = vld [vmem:[#allocation2 + $0xc8] sm:$0xff]
    %v54 = vld [vmem:[#allocation2 + $0xd0] sm:$0xff]
    %v55 = vld [vmem:[#allocation2 + $0xd8] sm:$0xff]
    %v56 = vld [vmem:[#allocation2 + $0xe0] sm:$0xff]
    %v57 = vld [vmem:[#allocation2 + $0xe8] sm:$0xff]
    %v58 = vld [vmem:[#allocation2 + $0xf0] sm:$0xff]
    %v59 = vld [vmem:[#allocation2 + $0xf8] sm:$0xff]
    %v60 = vld [vmem:[#allocation2 + $0x100] sm:$0xff]
    %v61 = vld [vmem:[#allocation2 + $0x108] sm:$0xff]
    %v62 = vld [vmem:[#allocation2 + $0x110] sm:$0xff]
    %v63 = vld [vmem:[#allocation2 + $0x118] sm:$0xff]
    %v64 = vld [vmem:[#allocation2 + $0x120] sm:$0xff]
    %v65 = vld [vmem:[#allocation2 + $0x128] sm:$0xff]
    %v66 = vld [vmem:[#allocation2 + $0x130] sm:$0xff]
    %v67 = vld [vmem:[#allocation2 + $0x138] sm:$0xff]
    %v68 = vld [vmem:[#allocation2 + $0x140] sm:$0xff]
    %v69 = vld [vmem:[#allocation2 + $0x148] sm:$0xff]
    %v70 = vld [vmem:[#allocation2 + $0x150] sm:$0xff]
    %v71 = vld [vmem:[#allocation2 + $0x158] sm:$0xff]
    %v72 = vld [vmem:[#allocation2 + $0x160] sm:$0xff]
    %v73 = vld [vmem:[#allocation2 + $0x168] sm:$0xff]
    %v74 = vld [vmem:[#allocation2 + $0x170] sm:$0xff]
    %v75 = vld [vmem:[#allocation2 + $0x178] sm:$0xff]
    %v76 = vld [vmem:[#allocation2 + $0x180] sm:$0xff]
    %v77 = vld [vmem:[#allocation2 + $0x188] sm:$0xff]
    %v78 = vld [vmem:[#allocation2 + $0x190] sm:$0xff]
    %v79 = vld [vmem:[#allocation2 + $0x198] sm:$0xff]
    %v80 = vld [vmem:[#allocation2 + $0x1a0] sm:$0xff]
    %v81 = vld [vmem:[#allocation2 + $0x1a8] sm:$0xff]
    %v82 = vld [vmem:[#allocation2 + $0x1b0] sm:$0xff]
    %v83 = vld [vmem:[#allocation2 + $0x1b8] sm:$0xff]
    %v84 = vld [vmem:[#allocation2 + $0x1c0] sm:$0xff]
    %v85 = vld [vmem:[#allocation2 + $0x1c8] sm:$0xff]
    %v86 = vld [vmem:[#allocation2 + $0x1d0] sm:$0xff]
    %v87 = vld [vmem:[#allocation2 + $0x1d8] sm:$0xff]
    %v88 = vld [vmem:[#allocation2 + $0x1e0] sm:$0xff]
    %v89 = vld [vmem:[#allocation2 + $0x1e8] sm:$0xff]
    %v90 = vld [vmem:[#allocation2 + $0x1f0] sm:$0xff]
    %v91 = vld [vmem:[#allocation2 + $0x1f8] sm:$0xff]
    %v92 = vld [vmem:[#allocation2 + $0x200] sm:$0xff]
    %v93 = vld [vmem:[#allocation2 + $0x208] sm:$0xff]
    %v94 = vld [vmem:[#allocation2 + $0x210] sm:$0xff]
    %v95 = vld [vmem:[#allocation2 + $0x218] sm:$0xff]
    %v96 = vld [vmem:[#allocation2 + $0x220] sm:$0xff]
    %v97 = vld [vmem:[#allocation2 + $0x228] sm:$0xff]
    %v98 = vld [vmem:[#allocation2 + $0x230] sm:$0xff]
    %v99 = vld [vmem:[#allocation2 + $0x238] sm:$0xff]
    %v100 = vld [vmem:[#allocation2 + $0x240] sm:$0xff]
    %v101 = vld [vmem:[#allocation2 + $0x248] sm:$0xff]
    %v102 = vld [vmem:[#allocation2 + $0x250] sm:$0xff]
    %v103 = vld [vmem:[#allocation2 + $0x258] sm:$0xff]
    %v104 = vld [vmem:[#allocation2 + $0x260] sm:$0xff]
    %v105 = vld [vmem:[#allocation2 + $0x268] sm:$0xff]
    %v106 = vld [vmem:[#allocation2 + $0x270] sm:$0xff]
    %v107 = vld [vmem:[#allocation2 + $0x278] sm:$0xff]
    %v108 = vld [vmem:[#allocation2 + $0x280] sm:$0xff]
    %v109 = vld [vmem:[#allocation2 + $0x288] sm:$0xff]
    %v110 = vld [vmem:[#allocation2 + $0x290] sm:$0xff]
    %v111 = vld [vmem:[#allocation2 + $0x298] sm:$0xff]
    %v112 = vld [vmem:[#allocation2 + $0x2a0] sm:$0xff]
    %v113 = vld [vmem:[#allocation2 + $0x2a8] sm:$0xff]
    %v114 = vld [vmem:[#allocation2 + $0x2b0] sm:$0xff]
    %v115 = vld [vmem:[#allocation2 + $0x2b8] sm:$0xff]
    %v116 = vld [vmem:[#allocation2 + $0x2c0] sm:$0xff]
    %v117 = vld [vmem:[#allocation2 + $0x2c8] sm:$0xff]
    %v118 = vld [vmem:[#allocation2 + $0x2d0] sm:$0xff]
    %v119 = vld [vmem:[#allocation2 + $0x2d8] sm:$0xff]
    %v120 = vld [vmem:[#allocation2 + $0x2e0] sm:$0xff]
    %v121 = vld [vmem:[#allocation2 + $0x2e8] sm:$0xff]
    %v122 = vld [vmem:[#allocation2 + $0x2f0] sm:$0xff]
    %v123 = vld [vmem:[#allocation2 + $0x2f8] sm:$0xff]
    %v124 = vld [vmem:[#allocation2 + $0x300] sm:$0xff]
    %v125 = vld [vmem:[#allocation2 + $0x308] sm:$0xff]
    %v126 = vld [vmem:[#allocation2 + $0x310] sm:$0xff]
    %v127 = vld [vmem:[#allocation2 + $0x318] sm:$0xff]
    %v128 = vld [vmem:[#allocation2 + $0x320] sm:$0xff]
    %v129 = vld [vmem:[#allocation2 + $0x328] sm:$0xff]
    %v130 = vld [vmem:[#allocation2 + $0x330] sm:$0xff]
    %v131 = vld [vmem:[#allocation2 + $0x338] sm:$0xff]
    %v132 = vld [vmem:[#allocation2 + $0x340] sm:$0xff]
    %v133 = vld [vmem:[#allocation2 + $0x348] sm:$0xff]
    %v134 = vld [vmem:[#allocation2 + $0x350] sm:$0xff]
    %v135 = vld [vmem:[#allocation2 + $0x358] sm:$0xff]
    %v136 = vld [vmem:[#allocation2 + $0x360] sm:$0xff]
    %v137 = vld [vmem:[#allocation2 + $0x368] sm:$0xff]
    %v138 = vld [vmem:[#allocation2 + $0x370] sm:$0xff]
    %v139 = vld [vmem:[#allocation2 + $0x378] sm:$0xff]
    %v140 = vld [vmem:[#allocation2 + $0x380] sm:$0xff]
    %v141 = vld [vmem:[#allocation2 + $0x388] sm:$0xff]
    %v142 = vld [vmem:[#allocation2 + $0x390] sm:$0xff]
    %v143 = vld [vmem:[#allocation2 + $0x398] sm:$0xff]
    %v144 = vld [vmem:[#allocation2 + $0x3a0] sm:$0xff]
    %v145 = vld [vmem:[#allocation2 + $0x3a8] sm:$0xff]
    %v146 = vld [vmem:[#allocation2 + $0x3b0] sm:$0xff]
    %v147 = vld [vmem:[#allocation2 + $0x3b8] sm:$0xff]
    %v148 = vld [vmem:[#allocation2 + $0x3c0] sm:$0xff]
    %v149 = vld [vmem:[#allocation2 + $0x3c8] sm:$0xff]
    %v150 = vld [vmem:[#allocation2 + $0x3d0] sm:$0xff]
    %v151 = vld [vmem:[#allocation2 + $0x3d8] sm:$0xff]
    %v152 = vld [vmem:[#allocation2 + $0x3e0] sm:$0xff]
    %v153 = vld [vmem:[#allocation2 + $0x3e8] sm:$0xff]
    %v154 = vld [vmem:[#allocation2 + $0x3f0] sm:$0xff]
    %v155 = vld [vmem:[#allocation2 + $0x3f8] sm:$0xff]
    %v156 = vld [vmem:[%s0] sm:$0xff]
    %v157 = vld [vmem:[%s0 + $0x8] sm:$0xff]
    %v158 = vld [vmem:[%s0 + $0x10] sm:$0xff]
    %v159 = vld [vmem:[%s0 + $0x18] sm:$0xff]
    %v160 = vld [vmem:[%s0 + $0x20] sm:$0xff]
    %v161 = vld [vmem:[%s0 + $0x28] sm:$0xff]
    %v162 = vld [vmem:[%s0 + $0x30] sm:$0xff]
    %v163 = vld [vmem:[%s0 + $0x38] sm:$0xff]
    %164 = vmatprep.subr.mxu0 %v29
    %165 = vmatpush1.msra.mxu0 %v28
    %166 = vmatprep.subr.mxu0 %v33
    %167 = vmatpush1.msra.mxu0 %v32
    %168 = vmatprep.subr.mxu0 %v37
    %169 = vmatpush1.msra.mxu0 %v36
    %170 = vmatprep.subr.mxu0 %v41
    %171 = vmatpush1.msra.mxu0 %v40
    %172 = vmatprep.subr.mxu0 %v45
    %173 = vmatpush1.msra.mxu0 %v44
    %174 = vmatprep.subr.mxu0 %v49
    %175 = vmatpush1.msra.mxu0 %v48
    %176 = vmatprep.subr.mxu0 %v53
    %177 = vmatpush1.msra.mxu0 %v52
    %178 = vmatprep.subr.mxu0 %v57
    %179 = vmatpush1.msra.mxu0 %v56
    %180 = vmatprep.subr.mxu0 %v61
    %181 = vmatpush1.msra.mxu0 %v60
    %182 = vmatprep.subr.mxu0 %v65
    %183 = vmatpush1.msra.mxu0 %v64
    %184 = vmatprep.subr.mxu0 %v69
    %185 = vmatpush1.msra.mxu0 %v68
    %186 = vmatprep.subr.mxu0 %v73
    %187 = vmatpush1.msra.mxu0 %v72
    %188 = vmatprep.subr.mxu0 %v77
    %189 = vmatpush1.msra.mxu0 %v76
    %190 = vmatprep.subr.mxu0 %v81
    %191 = vmatpush1.msra.mxu0 %v80
    %192 = vmatprep.subr.mxu0 %v85
    %193 = vmatpush1.msra.mxu0 %v84
    %194 = vmatprep.subr.mxu0 %v89
    %195 = vmatpush1.msra.mxu0 %v88
    %196 = vmatprep.subr.mxu0 %v93
    %197 = vmatpush1.msra.mxu0 %v92
    %198 = vmatprep.subr.mxu0 %v97
    %199 = vmatpush1.msra.mxu0 %v96
    %200 = vmatprep.subr.mxu0 %v101
    %201 = vmatpush1.msra.mxu0 %v100
    %202 = vmatprep.subr.mxu0 %v105
    %203 = vmatpush1.msra.mxu0 %v104
    %204 = vmatprep.subr.mxu0 %v109
    %205 = vmatpush1.msra.mxu0 %v108
    %206 = vmatprep.subr.mxu0 %v113
    %207 = vmatpush1.msra.mxu0 %v112
    %208 = vmatprep.subr.mxu0 %v117
    %209 = vmatpush1.msra.mxu0 %v116
    %210 = vmatprep.subr.mxu0 %v121
    %211 = vmatpush1.msra.mxu0 %v120
    %212 = vmatprep.subr.mxu0 %v125
    %213 = vmatpush1.msra.mxu0 %v124
    %214 = vmatprep.subr.mxu0 %v129
    %215 = vmatpush1.msra.mxu0 %v128
    %216 = vmatprep.subr.mxu0 %v133
    %217 = vmatpush1.msra.mxu0 %v132
    %218 = vmatprep.subr.mxu0 %v137
    %219 = vmatpush1.msra.mxu0 %v136
    %220 = vmatprep.subr.mxu0 %v141
    %221 = vmatpush1.msra.mxu0 %v140
    %222 = vmatprep.subr.mxu0 %v145
    %223 = vmatpush1.msra.mxu0 %v144
    %224 = vmatprep.subr.mxu0 %v149
    %225 = vmatpush1.msra.mxu0 %v148
    %226 = vmatprep.subr.mxu0 %v153
    %227 = vmatpush1.msra.mxu0 %v152
    %228 = vmatprep.mubr.f32.mxu0 %v157
    %229 = vmatmul.mubr.f32.gmra.mrb[0].mxu0 %v156
    %v230 = vpop.f32.mrb[0].mxu0
    %v231 = vadd.f32 0.0, %v230
    %v232 = vpop.f32.mrb[0].mxu0
    %v233 = vadd.f32 0.0, %v232
    %234 = vmatprep.mubr.f32.mxu0 %v159
    %235 = vmatmul.mubr.f32.gmra.mrb[0].mxu0 %v158
    %v236 = vpop.f32.mrb[0].mxu0
    %v237 = vadd.f32 0.0, %v236
    %v238 = vpop.f32.mrb[0].mxu0
    %v239 = vadd.f32 0.0, %v238
    %240 = vmatprep.mubr.f32.mxu0 %v161
    %241 = vmatmul.mubr.f32.gmra.mrb[0].mxu0 %v160
    %v242 = vpop.f32.mrb[0].mxu0
    %v243 = vadd.f32 0.0, %v242
    %v244 = vpop.f32.mrb[0].mxu0
    %v245 = vadd.f32 0.0, %v244
    %246 = vmatprep.mubr.f32.mxu0 %v163
    %247 = vmatmul.mubr.f32.gmra.mrb[0].mxu0 %v162
    %v248 = vpop.f32.mrb[0].mxu0
    %v249 = vadd.f32 0.0, %v248
    %v250 = vpop.f32.mrb[0].mxu0
    %v251 = vadd.f32 0.0, %v250
    %252 = vdwg.mxu0
    %253 = vmatprep.subr.mxu0 %v31
    %254 = vmatpush1.msra.mxu0 %v30
    %255 = vmatprep.subr.mxu0 %v35
    %256 = vmatpush1.msra.mxu0 %v34
    %257 = vmatprep.subr.mxu0 %v39
    %258 = vmatpush1.msra.mxu0 %v38
    %259 = vmatprep.subr.mxu0 %v43
    %260 = vmatpush1.msra.mxu0 %v42
    %261 = vmatprep.subr.mxu0 %v47
    %262 = vmatpush1.msra.mxu0 %v46
    %263 = vmatprep.subr.mxu0 %v51
    %264 = vmatpush1.msra.mxu0 %v50
    %265 = vmatprep.subr.mxu0 %v55
    %266 = vmatpush1.msra.mxu0 %v54
    %267 = vmatprep.subr.mxu0 %v59
    %268 = vmatpush1.msra.mxu0 %v58
    %269 = vmatprep.subr.mxu0 %v63
    %270 = vmatpush1.msra.mxu0 %v62
    %271 = vmatprep.subr.mxu0 %v67
    %272 = vmatpush1.msra.mxu0 %v66
    %273 = vmatprep.subr.mxu0 %v71
    %274 = vmatpush1.msra.mxu0 %v70
    %275 = vmatprep.subr.mxu0 %v75
    %276 = vmatpush1.msra.mxu0 %v74
    %277 = vmatprep.subr.mxu0 %v79
    %278 = vmatpush1.msra.mxu0 %v78
    %279 = vmatprep.subr.mxu0 %v83
    %280 = vmatpush1.msra.mxu0 %v82
    %281 = vmatprep.subr.mxu0 %v87
    %282 = vmatpush1.msra.mxu0 %v86
    %283 = vmatprep.subr.mxu0 %v91
    %284 = vmatpush1.msra.mxu0 %v90
    %285 = vmatprep.subr.mxu0 %v95
    %286 = vmatpush1.msra.mxu0 %v94
    %287 = vmatprep.subr.mxu0 %v99
    %288 = vmatpush1.msra.mxu0 %v98
    %289 = vmatprep.subr.mxu0 %v103
    %290 = vmatpush1.msra.mxu0 %v102
    %291 = vmatprep.subr.mxu0 %v107
    %292 = vmatpush1.msra.mxu0 %v106
    %293 = vmatprep.subr.mxu0 %v111
    %294 = vmatpush1.msra.mxu0 %v110
    %295 = vmatprep.subr.mxu0 %v115
    %296 = vmatpush1.msra.mxu0 %v114
    %297 = vmatprep.subr.mxu0 %v119
    %298 = vmatpush1.msra.mxu0 %v118
    %299 = vmatprep.subr.mxu0 %v123
    %300 = vmatpush1.msra.mxu0 %v122
    %301 = vmatprep.subr.mxu0 %v127
    %302 = vmatpush1.msra.mxu0 %v126
    %303 = vmatprep.subr.mxu0 %v131
    %304 = vmatpush1.msra.mxu0 %v130
    %305 = vmatprep.subr.mxu0 %v135
    %306 = vmatpush1.msra.mxu0 %v134
    %307 = vmatprep.subr.mxu0 %v139
    %308 = vmatpush1.msra.mxu0 %v138
    %309 = vmatprep.subr.mxu0 %v143
    %310 = vmatpush1.msra.mxu0 %v142
    %311 = vmatprep.subr.mxu0 %v147
    %312 = vmatpush1.msra.mxu0 %v146
    %313 = vmatprep.subr.mxu0 %v151
    %314 = vmatpush1.msra.mxu0 %v150
    %315 = vmatprep.subr.mxu0 %v155
    %316 = vmatpush1.msra.mxu0 %v154
    %317 = vmatprep.mubr.f32.mxu0 %v157
    %318 = vmatmul.mubr.f32.gmra.mrb[0].mxu0 %v156
    %v319 = vpop.f32.mrb[0].mxu0
    %v320 = vadd.f32 0.0, %v319
    %v321 = vpop.f32.mrb[0].mxu0
    %v322 = vadd.f32 0.0, %v321
    %323 = vmatprep.mubr.f32.mxu0 %v159
    %324 = vmatmul.mubr.f32.gmra.mrb[0].mxu0 %v158
    %v325 = vpop.f32.mrb[0].mxu0
    %v326 = vadd.f32 0.0, %v325
    %v327 = vpop.f32.mrb[0].mxu0
    %v328 = vadd.f32 0.0, %v327
    %329 = vmatprep.mubr.f32.mxu0 %v161
    %330 = vmatmul.mubr.f32.gmra.mrb[0].mxu0 %v160
    %v331 = vpop.f32.mrb[0].mxu0
    %v332 = vadd.f32 0.0, %v331
    %v333 = vpop.f32.mrb[0].mxu0
    %v334 = vadd.f32 0.0, %v333
    %335 = vmatprep.mubr.f32.mxu0 %v163
    %336 = vmatmul.mubr.f32.gmra.mrb[0].mxu0 %v162
    %v337 = vpop.f32.mrb[0].mxu0
    %v338 = vadd.f32 0.0, %v337
    %v339 = vpop.f32.mrb[0].mxu0
    %v340 = vadd.f32 0.0, %v339
    %341 = vdwg.mxu0
    %v342 = vmul.f32 %v231, %v231
    %v343 = vmul.f32 %v233, %v233
    %v344 = vmul.f32 %v237, %v237
    %v345 = vmul.f32 %v239, %v239
    %v346 = vmul.f32 %v243, %v243
    %v347 = vmul.f32 %v245, %v245
    %v348 = vmul.f32 %v249, %v249
    %v349 = vmul.f32 %v251, %v251
    %v350 = vmul.f32 %v320, %v320
    %v351 = vmul.f32 %v322, %v322
    %v352 = vmul.f32 %v326, %v326
    %v353 = vmul.f32 %v328, %v328
    %v354 = vmul.f32 %v332, %v332
    %v355 = vmul.f32 %v334, %v334
    %v356 = vmul.f32 %v338, %v338
    %v357 = vmul.f32 %v340, %v340
    %v358 = vadd.f32 %v342, %v350
    %v359 = vadd.f32 %v343, %v351
    %v360 = vadd.f32 %v344, %v352
    %v361 = vadd.f32 %v345, %v353
    %v362 = vadd.f32 %v346, %v354
    %v363 = vadd.f32 %v347, %v355
    %v364 = vadd.f32 %v348, %v356
    %v365 = vadd.f32 %v349, %v357
    %v366 = vmax.f32 %v358, 1e-14
    %v367 = vmax.f32 %v359, 1e-14
    %v368 = vmax.f32 %v360, 1e-14
    %v369 = vmax.f32 %v361, 1e-14
    %v370 = vmax.f32 %v362, 1e-14
    %v371 = vmax.f32 %v363, 1e-14
    %v372 = vmax.f32 %v364, 1e-14
    %v373 = vmax.f32 %v365, 1e-14
    %v374 = vlog2.pop %v366
    %v375 = vmul.f32 %v374, 0.6931472
    %v376 = vlog2.pop %v367
    %v377 = vmul.f32 %v376, 0.6931472
    %v378 = vlog2.pop %v368
    %v379 = vmul.f32 %v378, 0.6931472
    %v380 = vlog2.pop %v369
    %v381 = vmul.f32 %v380, 0.6931472
    %v382 = vlog2.pop %v370
    %v383 = vmul.f32 %v382, 0.6931472
    %v384 = vlog2.pop %v371
    %v385 = vmul.f32 %v384, 0.6931472
    %v386 = vlog2.pop %v372
    %v387 = vmul.f32 %v386, 0.6931472
    %v388 = vlog2.pop %v373
    %v389 = vmul.f32 %v388, 0.6931472
    %v390 = vmul.f32 %v375, 0.15
    %v391 = vmul.f32 %v377, 0.15
    %v392 = vmul.f32 %v379, 0.15
    %v393 = vmul.f32 %v381, 0.15
    %v394 = vmul.f32 %v383, 0.15
    %v395 = vmul.f32 %v385, 0.15
    %v396 = vmul.f32 %v387, 0.15
    %v397 = vmul.f32 %v389, 0.15
    %v398 = vmul.f32 %v390, 1.442695
    %v399 = vpow.pop %v398
    %v400 = vmul.f32 %v391, 1.442695
    %v401 = vpow.pop %v400
    %v402 = vmul.f32 %v392, 1.442695
    %v403 = vpow.pop %v402
    %v404 = vmul.f32 %v393, 1.442695
    %v405 = vpow.pop %v404
    %v406 = vmul.f32 %v394, 1.442695
    %v407 = vpow.pop %v406
    %v408 = vmul.f32 %v395, 1.442695
    %v409 = vpow.pop %v408
    %v410 = vmul.f32 %v396, 1.442695
    %v411 = vpow.pop %v410
    %v412 = vmul.f32 %v397, 1.442695
    %v413 = vpow.pop %v412
    %v414 = vld [vmem:[%s1] sm:$0xff]
    %v415 = vld [vmem:[%s1 + $0x8] sm:$0xff]
    %v416 = vld [vmem:[%s1 + $0x10] sm:$0xff]
    %v417 = vld [vmem:[%s1 + $0x18] sm:$0xff]
    %v418 = vld [vmem:[%s1 + $0x20] sm:$0xff]
    %v419 = vld [vmem:[%s1 + $0x28] sm:$0xff]
    %v420 = vld [vmem:[%s1 + $0x30] sm:$0xff]
    %v421 = vld [vmem:[%s1 + $0x38] sm:$0xff]
    %422 = vmatprep.subr.mxu0 %v29
    %423 = vmatpush1.msra.mxu0 %v28
    %424 = vmatprep.subr.mxu0 %v33
    %425 = vmatpush1.msra.mxu0 %v32
    %426 = vmatprep.subr.mxu0 %v37
    %427 = vmatpush1.msra.mxu0 %v36
    %428 = vmatprep.subr.mxu0 %v41
    %429 = vmatpush1.msra.mxu0 %v40
    %430 = vmatprep.subr.mxu0 %v45
    %431 = vmatpush1.msra.mxu0 %v44
    %432 = vmatprep.subr.mxu0 %v49
    %433 = vmatpush1.msra.mxu0 %v48
    %434 = vmatprep.subr.mxu0 %v53
    %435 = vmatpush1.msra.mxu0 %v52
    %436 = vmatprep.subr.mxu0 %v57
    %437 = vmatpush1.msra.mxu0 %v56
    %438 = vmatprep.subr.mxu0 %v61
    %439 = vmatpush1.msra.mxu0 %v60
    %440 = vmatprep.subr.mxu0 %v65
    %441 = vmatpush1.msra.mxu0 %v64
    %442 = vmatprep.subr.mxu0 %v69
    %443 = vmatpush1.msra.mxu0 %v68
    %444 = vmatprep.subr.mxu0 %v73
    %445 = vmatpush1.msra.mxu0 %v72
    %446 = vmatprep.subr.mxu0 %v77
    %447 = vmatpush1.msra.mxu0 %v76
    %448 = vmatprep.subr.mxu0 %v81
    %449 = vmatpush1.msra.mxu0 %v80
    %450 = vmatprep.subr.mxu0 %v85
    %451 = vmatpush1.msra.mxu0 %v84
    %452 = vmatprep.subr.mxu0 %v89
    %453 = vmatpush1.msra.mxu0 %v88
    %454 = vmatprep.subr.mxu0 %v93
    %455 = vmatpush1.msra.mxu0 %v92
    %456 = vmatprep.subr.mxu0 %v97
    %457 = vmatpush1.msra.mxu0 %v96
    %458 = vmatprep.subr.mxu0 %v101
    %459 = vmatpush1.msra.mxu0 %v100
    %460 = vmatprep.subr.mxu0 %v105
    %461 = vmatpush1.msra.mxu0 %v104
    %462 = vmatprep.subr.mxu0 %v109
    %463 = vmatpush1.msra.mxu0 %v108
    %464 = vmatprep.subr.mxu0 %v113
    %465 = vmatpush1.msra.mxu0 %v112
    %466 = vmatprep.subr.mxu0 %v117
    %467 = vmatpush1.msra.mxu0 %v116
    %468 = vmatprep.subr.mxu0 %v121
    %469 = vmatpush1.msra.mxu0 %v120
    %470 = vmatprep.subr.mxu0 %v125
    %471 = vmatpush1.msra.mxu0 %v124
    %472 = vmatprep.subr.mxu0 %v129
    %473 = vmatpush1.msra.mxu0 %v128
    %474 = vmatprep.subr.mxu0 %v133
    %475 = vmatpush1.msra.mxu0 %v132
    %476 = vmatprep.subr.mxu0 %v137
    %477 = vmatpush1.msra.mxu0 %v136
    %478 = vmatprep.subr.mxu0 %v141
    %479 = vmatpush1.msra.mxu0 %v140
    %480 = vmatprep.subr.mxu0 %v145
    %481 = vmatpush1.msra.mxu0 %v144
    %482 = vmatprep.subr.mxu0 %v149
    %483 = vmatpush1.msra.mxu0 %v148
    %484 = vmatprep.subr.mxu0 %v153
    %485 = vmatpush1.msra.mxu0 %v152
    %486 = vmatprep.mubr.f32.mxu0 %v415
    %487 = vmatmul.mubr.f32.gmra.mrb[0].mxu0 %v414
    %v488 = vpop.f32.mrb[0].mxu0
    %v489 = vadd.f32 0.0, %v488
    %v490 = vpop.f32.mrb[0].mxu0
    %v491 = vadd.f32 0.0, %v490
    %492 = vmatprep.mubr.f32.mxu0 %v417
    %493 = vmatmul.mubr.f32.gmra.mrb[0].mxu0 %v416
    %v494 = vpop.f32.mrb[0].mxu0
    %v495 = vadd.f32 0.0, %v494
    %v496 = vpop.f32.mrb[0].mxu0
    %v497 = vadd.f32 0.0, %v496
    %498 = vmatprep.mubr.f32.mxu0 %v419
    %499 = vmatmul.mubr.f32.gmra.mrb[0].mxu0 %v418
    %v500 = vpop.f32.mrb[0].mxu0
    %v501 = vadd.f32 0.0, %v500
    %v502 = vpop.f32.mrb[0].mxu0
    %v503 = vadd.f32 0.0, %v502
    %504 = vmatprep.mubr.f32.mxu0 %v421
    %505 = vmatmul.mubr.f32.gmra.mrb[0].mxu0 %v420
    %v506 = vpop.f32.mrb[0].mxu0
    %v507 = vadd.f32 0.0, %v506
    %v508 = vpop.f32.mrb[0].mxu0
    %v509 = vadd.f32 0.0, %v508
    %510 = vdwg.mxu0
    %511 = vmatprep.subr.mxu0 %v31
    %512 = vmatpush1.msra.mxu0 %v30
    %513 = vmatprep.subr.mxu0 %v35
    %514 = vmatpush1.msra.mxu0 %v34
    %515 = vmatprep.subr.mxu0 %v39
    %516 = vmatpush1.msra.mxu0 %v38
    %517 = vmatprep.subr.mxu0 %v43
    %518 = vmatpush1.msra.mxu0 %v42
    %519 = vmatprep.subr.mxu0 %v47
    %520 = vmatpush1.msra.mxu0 %v46
    %521 = vmatprep.subr.mxu0 %v51
    %522 = vmatpush1.msra.mxu0 %v50
    %523 = vmatprep.subr.mxu0 %v55
    %524 = vmatpush1.msra.mxu0 %v54
    %525 = vmatprep.subr.mxu0 %v59
    %526 = vmatpush1.msra.mxu0 %v58
    %527 = vmatprep.subr.mxu0 %v63
    %528 = vmatpush1.msra.mxu0 %v62
    %529 = vmatprep.subr.mxu0 %v67
    %530 = vmatpush1.msra.mxu0 %v66
    %531 = vmatprep.subr.mxu0 %v71
    %532 = vmatpush1.msra.mxu0 %v70
    %533 = vmatprep.subr.mxu0 %v75
    %534 = vmatpush1.msra.mxu0 %v74
    %535 = vmatprep.subr.mxu0 %v79
    %536 = vmatpush1.msra.mxu0 %v78
    %537 = vmatprep.subr.mxu0 %v83
    %538 = vmatpush1.msra.mxu0 %v82
    %539 = vmatprep.subr.mxu0 %v87
    %540 = vmatpush1.msra.mxu0 %v86
    %541 = vmatprep.subr.mxu0 %v91
    %542 = vmatpush1.msra.mxu0 %v90
    %543 = vmatprep.subr.mxu0 %v95
    %544 = vmatpush1.msra.mxu0 %v94
    %545 = vmatprep.subr.mxu0 %v99
    %546 = vmatpush1.msra.mxu0 %v98
    %547 = vmatprep.subr.mxu0 %v103
    %548 = vmatpush1.msra.mxu0 %v102
    %549 = vmatprep.subr.mxu0 %v107
    %550 = vmatpush1.msra.mxu0 %v106
    %551 = vmatprep.subr.mxu0 %v111
    %552 = vmatpush1.msra.mxu0 %v110
    %553 = vmatprep.subr.mxu0 %v115
    %554 = vmatpush1.msra.mxu0 %v114
    %555 = vmatprep.subr.mxu0 %v119
    %556 = vmatpush1.msra.mxu0 %v118
    %557 = vmatprep.subr.mxu0 %v123
    %558 = vmatpush1.msra.mxu0 %v122
    %559 = vmatprep.subr.mxu0 %v127
    %560 = vmatpush1.msra.mxu0 %v126
    %561 = vmatprep.subr.mxu0 %v131
    %562 = vmatpush1.msra.mxu0 %v130
    %563 = vmatprep.subr.mxu0 %v135
    %564 = vmatpush1.msra.mxu0 %v134
    %565 = vmatprep.subr.mxu0 %v139
    %566 = vmatpush1.msra.mxu0 %v138
    %567 = vmatprep.subr.mxu0 %v143
    %568 = vmatpush1.msra.mxu0 %v142
    %569 = vmatprep.subr.mxu0 %v147
    %570 = vmatpush1.msra.mxu0 %v146
    %571 = vmatprep.subr.mxu0 %v151
    %572 = vmatpush1.msra.mxu0 %v150
    %573 = vmatprep.subr.mxu0 %v155
    %574 = vmatpush1.msra.mxu0 %v154
    %575 = vmatprep.mubr.f32.mxu0 %v415
    %576 = vmatmul.mubr.f32.gmra.mrb[0].mxu0 %v414
    %v577 = vpop.f32.mrb[0].mxu0
    %v578 = vadd.f32 0.0, %v577
    %v579 = vpop.f32.mrb[0].mxu0
    %v580 = vadd.f32 0.0, %v579
    %581 = vmatprep.mubr.f32.mxu0 %v417
    %582 = vmatmul.mubr.f32.gmra.mrb[0].mxu0 %v416
    %v583 = vpop.f32.mrb[0].mxu0
    %v584 = vadd.f32 0.0, %v583
    %v585 = vpop.f32.mrb[0].mxu0
    %v586 = vadd.f32 0.0, %v585
    %587 = vmatprep.mubr.f32.mxu0 %v419
    %588 = vmatmul.mubr.f32.gmra.mrb[0].mxu0 %v418
    %v589 = vpop.f32.mrb[0].mxu0
    %v590 = vadd.f32 0.0, %v589
    %v591 = vpop.f32.mrb[0].mxu0
    %v592 = vadd.f32 0.0, %v591
    %593 = vmatprep.mubr.f32.mxu0 %v421
    %594 = vmatmul.mubr.f32.gmra.mrb[0].mxu0 %v420
    %v595 = vpop.f32.mrb[0].mxu0
    %v596 = vadd.f32 0.0, %v595
    %v597 = vpop.f32.mrb[0].mxu0
    %v598 = vadd.f32 0.0, %v597
    %599 = vdwg.mxu0
    %v600 = vmul.f32 %v489, %v489
    %v601 = vmul.f32 %v491, %v491
    %v602 = vmul.f32 %v495, %v495
    %v603 = vmul.f32 %v497, %v497
    %v604 = vmul.f32 %v501, %v501
    %v605 = vmul.f32 %v503, %v503
    %v606 = vmul.f32 %v507, %v507
    %v607 = vmul.f32 %v509, %v509
    %v608 = vmul.f32 %v578, %v578
    %v609 = vmul.f32 %v580, %v580
    %v610 = vmul.f32 %v584, %v584
    %v611 = vmul.f32 %v586, %v586
    %v612 = vmul.f32 %v590, %v590
    %v613 = vmul.f32 %v592, %v592
    %v614 = vmul.f32 %v596, %v596
    %v615 = vmul.f32 %v598, %v598
    %v616 = vadd.f32 %v600, %v608
    %v617 = vadd.f32 %v601, %v609
    %v618 = vadd.f32 %v602, %v610
    %v619 = vadd.f32 %v603, %v611
    %v620 = vadd.f32 %v604, %v612
    %v621 = vadd.f32 %v605, %v613
    %v622 = vadd.f32 %v606, %v614
    %v623 = vadd.f32 %v607, %v615
    %v624 = vmax.f32 %v616, 1e-14
    %v625 = vmax.f32 %v617, 1e-14
    %v626 = vmax.f32 %v618, 1e-14
    %v627 = vmax.f32 %v619, 1e-14
    %v628 = vmax.f32 %v620, 1e-14
    %v629 = vmax.f32 %v621, 1e-14
    %v630 = vmax.f32 %v622, 1e-14
    %v631 = vmax.f32 %v623, 1e-14
    %v632 = vlog2.pop %v624
    %v633 = vmul.f32 %v632, 0.6931472
    %v634 = vlog2.pop %v625
    %v635 = vmul.f32 %v634, 0.6931472
    %v636 = vlog2.pop %v626
    %v637 = vmul.f32 %v636, 0.6931472
    %v638 = vlog2.pop %v627
    %v639 = vmul.f32 %v638, 0.6931472
    %v640 = vlog2.pop %v628
    %v641 = vmul.f32 %v640, 0.6931472
    %v642 = vlog2.pop %v629
    %v643 = vmul.f32 %v642, 0.6931472
    %v644 = vlog2.pop %v630
    %v645 = vmul.f32 %v644, 0.6931472
    %v646 = vlog2.pop %v631
    %v647 = vmul.f32 %v646, 0.6931472
    %v648 = vmul.f32 %v633, 0.15
    %v649 = vmul.f32 %v635, 0.15
    %v650 = vmul.f32 %v637, 0.15
    %v651 = vmul.f32 %v639, 0.15
    %v652 = vmul.f32 %v641, 0.15
    %v653 = vmul.f32 %v643, 0.15
    %v654 = vmul.f32 %v645, 0.15
    %v655 = vmul.f32 %v647, 0.15
    %v656 = vmul.f32 %v648, 1.442695
    %v657 = vpow.pop %v656
    %v658 = vmul.f32 %v649, 1.442695
    %v659 = vpow.pop %v658
    %v660 = vmul.f32 %v650, 1.442695
    %v661 = vpow.pop %v660
    %v662 = vmul.f32 %v651, 1.442695
    %v663 = vpow.pop %v662
    %v664 = vmul.f32 %v652, 1.442695
    %v665 = vpow.pop %v664
    %v666 = vmul.f32 %v653, 1.442695
    %v667 = vpow.pop %v666
    %v668 = vmul.f32 %v654, 1.442695
    %v669 = vpow.pop %v668
    %v670 = vmul.f32 %v655, 1.442695
    %v671 = vpow.pop %v670
    %v672 = vsub.f32 %v399, %v657
    %v673 = vsub.f32 %v401, %v659
    %v674 = vsub.f32 %v403, %v661
    %v675 = vsub.f32 %v405, %v663
    %v676 = vsub.f32 %v407, %v665
    %v677 = vsub.f32 %v409, %v667
    %v678 = vsub.f32 %v411, %v669
    %v679 = vsub.f32 %v413, %v671
    %v680 = vmul.f32 %v672, %v672
    %v681 = vmul.f32 %v673, %v673
    %v682 = vmul.f32 %v674, %v674
    %v683 = vmul.f32 %v675, %v675
    %v684 = vmul.f32 %v676, %v676
    %v685 = vmul.f32 %v677, %v677
    %v686 = vmul.f32 %v678, %v678
    %v687 = vmul.f32 %v679, %v679
    %v688 = vadd.f32 %v680, %v681
    %v689 = vadd.f32 %v688, %v682
    %v690 = vadd.f32 %v689, %v683
    %v691 = vadd.f32 %v690, %v684
    %v692 = vadd.f32 %v691, %v685
    %v693 = vadd.f32 %v692, %v686
    %v694 = vadd.f32 %v693, %v687
    %695 = vadd.xlane.f32.xlu0 %v694
    %v696 = vpop.xlane.xlu0 %695
    %v697 = vrot.slane %v696, 4
    %v698 = vadd.f32 %v696, %v697
    %v699 = vrot.slane %v698, 2
    %v700 = vadd.f32 %v698, %v699
    %v701 = vrot.slane %v700, 1
    %v702 = vadd.f32 %v700, %v701
    %s703 = vtos %v702
    %v704 = vstv %s703
    %705 = vst [vmem:[%s3] sm:$0xff] %v704
    // Predicated region
    $region18: #{multiscale_spectrogram_loss.3} parent=1 // pred_check
      _
    $region19: #{multiscale_spectrogram_loss.3} parent=1 // pred_check_branch
      %707 = sbr.rel (0) target = $region21
    $region20: #{multiscale_spectrogram_loss.3} parent=1 // pred_region
      _
    $region21: #{multiscale_spectrogram_loss.3} parent=1 // pred_fallthru
      _
    // Predicated region
    $region22: #{multiscale_spectrogram_loss.3} parent=1 // pred_check
      _
    $region23: #{multiscale_spectrogram_loss.3} parent=1 // pred_check_branch
      %709 = sbr.rel (0) target = $region25
    $region24: #{multiscale_spectrogram_loss.3} parent=1 // pred_region
      _
    $region25: #{multiscale_spectrogram_loss.3} parent=1 // pred_fallthru
      _
    %710 = vsyncpa [#allocation3], 1

</llo_original>
